<compile_context>
chip_gen: v5e
topology: v5e:2x2
jax: 0.10.0
libtpu: 0.0.40
codegen_flags: <defaults>
</compile_context>

<pallas_src>
import functools

import jax
import jax.numpy as jnp
from jax import lax
from jax.experimental import pallas as pl
from jax.experimental.pallas import tpu as pltpu


def _round_up(x, m):
    return ((x + m - 1) // m) * m


def _cdiv(a, b):
    return -(-a // b)


def _fused_channel_attention_kernel(gamma_ref, x_ref, o_ref, aff_ref, *,
                                    c_valid, c_pad):
    """Two-phase fused channel attention over one batch block."""
    p = pl.program_id(1)
    k = pl.program_id(2)
    kn = pl.num_programs(2)

    @pl.when(p == 0)
    def _build_attention():
        @pl.when(k == 0)
        def _():
            aff_ref[...] = jnp.zeros_like(aff_ref)

        xt = x_ref[...]                                    # (Bt, C_pad, Tn), native dtype
        # Batched X @ X^T contracting the shared N axis (no transpose copy,
        # no f32 upcast of the MXU inputs; f32 accumulate via preferred type).
        aff_ref[...] += lax.dot_general(
            xt, xt,
            dimension_numbers=(((2,), (2,)), ((0,), (0,))),
            preferred_element_type=jnp.float32)

        @pl.when(k == kn - 1)
        def _softmax():
            # softmax(rowmax(aff) - aff) == softmax(-aff): one stabilizing reduce.
            logits = -aff_ref[...]                         # (Bt, C_pad, C_pad)
            if c_pad > c_valid:                            # static (trace-time)
                col = lax.broadcasted_iota(jnp.int32, logits.shape, 2)
                logits = jnp.where(col < c_valid, logits, -jnp.inf)
            m = jnp.max(logits, axis=-1, keepdims=True)
            e = jnp.exp(logits - m)
            denom = jnp.sum(e, axis=-1, keepdims=True)
            # Fold gamma into the weights so phase 1 is just att @ x + x
            # (saves a full-tile VPU multiply per N step in phase 1).
            aff_ref[...] = (gamma_ref[0] * e) * pl.reciprocal(denom, approx=True)

    @pl.when(p == 1)
    def _apply_attention():
        xt = x_ref[...]                                    # (Bt, C_pad, Tn)
        att = aff_ref[...].astype(xt.dtype)                # bf16 MXU rate for bf16 x
        w = lax.dot_general(
            att, xt,
            dimension_numbers=(((2,), (1,)), ((0,), (0,))),
            preferred_element_type=jnp.float32)            # (Bt, C_pad, Tn)
        o_ref[...] = (w + xt.astype(jnp.float32)).astype(o_ref.dtype)


def _vmem_capacity_bytes():
    try:
        return int(pltpu.get_tpu_info().vmem_capacity_bytes)
    except Exception:
        return 64 * 1024 * 1024        # conservative (v7x per-TC size)


def channel_attention_block(x, gamma, *, tile_budget_bytes=None,
                            vmem_limit_bytes=None):
    """x: (B, C, H, W), gamma: (1,) -> (B, C, H, W); matches ChannelAttentionBlock."""
    B, C, H, W = x.shape
    N = H * W
    itemsize = jnp.dtype(x.dtype).itemsize

    # Generation-aware budgets: ~96 MiB / 8 MiB tiles on 128 MiB VMEM chips
    # (v5e/v6e), ~48 MiB / 4 MiB on v7x's 64 MiB per TensorCore.
    vmem_cap = _vmem_capacity_bytes()
    if vmem_limit_bytes is None:
        vmem_limit_bytes = min(vmem_cap * 3 // 4, 96 * 1024 * 1024)
    if tile_budget_bytes is None:
        tile_budget_bytes = min(vmem_limit_bytes // 12, 8 * 1024 * 1024)

    # Channel padding only to the sublane multiple (att stays in VMEM, so no
    # lane-dense HBM writeback of it to optimize for).
    C_pad = _round_up(C, 8)
    row_bytes = C_pad * itemsize

    # Lane-dense N tiling, balanced to minimize padding; Kn == 1 => whole-slab
    # fused fast path (X read from HBM exactly once).
    tn_max = max(128, (tile_budget_bytes // row_bytes) // 128 * 128)
    n_lanes = _round_up(N, 128)
    if n_lanes <= tn_max:
        Kn, Tn = 1, n_lanes
    else:
        Kn = _cdiv(N, tn_max)
        Tn = _round_up(_cdiv(N, Kn), 128)
    N_pad = Kn * Tn

    x_flat = x.reshape(B, C, N)
    padded = (C_pad != C) or (N_pad != N)
    if padded:
        x_flat = jnp.pad(x_flat, ((0, 0), (0, C_pad - C), (0, N_pad - N)))

    # Batch-block to amortize per-grid-step overhead while keeping the VMEM
    # footprint (2 in + 2 out x-tile buffers + att scratch) within budget.
    tile_bytes = C_pad * Tn * itemsize
    aff_bytes = C_pad * C_pad * 4
    Bt = 1
    for bt in range(1, B + 1):
        if B % bt:
            continue
        if bt * tile_bytes > tile_budget_bytes:
            continue
        if bt * (4 * tile_bytes + aff_bytes) > (vmem_limit_bytes * 4) // 5:
            continue
        if B > 1 and B // bt < 2:
            # Keep >=2 batch blocks so the parallel B axis can shard across the
            # two TensorCores on v7x.
            # TODO(synk): relax on 1-TC chips (v5e/v6e) where it only adds steps.
            continue
        Bt = bt
    Bb = B // Bt

    out_flat = pl.pallas_call(
        functools.partial(_fused_channel_attention_kernel,
                          c_valid=C, c_pad=C_pad),
        out_shape=jax.ShapeDtypeStruct((B, C_pad, N_pad), x.dtype),
        grid=(Bb, 2, Kn),
        in_specs=[
            pl.BlockSpec(memory_space=pltpu.MemorySpace.SMEM),           # gamma
            pl.BlockSpec((Bt, C_pad, Tn), lambda b, p, k: (b, 0, k)),    # x tile
        ],
        # k*p keeps the output block pinned at (b,0,0) during phase 0 so each
        # output block is written back to HBM exactly once (by phase 1).
        out_specs=pl.BlockSpec((Bt, C_pad, Tn), lambda b, p, k: (b, 0, k * p)),
        scratch_shapes=[pltpu.VMEM((Bt, C_pad, C_pad), jnp.float32)],
        compiler_params=pltpu.CompilerParams(
            dimension_semantics=("parallel", "arbitrary", "arbitrary"),
            vmem_limit_bytes=int(vmem_limit_bytes)),
    )(gamma, x_flat)

    if padded:
        # TODO(synk): unaligned C / N still pays a post-kernel slice copy; the
        # aligned (common) case returns with a metadata-only reshape.
        out_flat = out_flat[:, :C, :N]
    return out_flat.reshape(B, C, H, W)


def _reference(x, gamma):
    B, C, H, W = x.shape
    q = x.reshape(B, C, -1)
    aff = jnp.einsum("bcn,bdn->bcd", q, q)
    aff_new = jnp.max(aff, axis=-1, keepdims=True) - aff
    att = jax.nn.softmax(aff_new, axis=-1)
    w = jnp.einsum("bcd,bdn->bcn", att, q).reshape(B, C, H, W)
    return gamma[0] * w + x


if __name__ == "__main__":
    key = jax.random.PRNGKey(0)
    k1, k2, k3 = jax.random.split(key, 3)

    # The module initializes gamma = 0; use a nonzero value so the attention
    # path is actually exercised by the check.
    gamma = jnp.array([0.5], dtype=jnp.float32)

    # Tolerance accounts for the EUP approximate reciprocal in the softmax.
    ATOL = RTOL = 5e-3

    # Case 1: aligned shapes -> fused single-pass fast path (Kn == 1).
    x1 = jax.random.normal(k1, (2, 8, 16, 16), dtype=jnp.float32)
    out1 = jax.block_until_ready(channel_attention_block(x1, gamma))
    ref1 = _reference(x1, gamma)
    assert out1.shape == x1.shape
    assert jnp.allclose(out1, ref1, atol=ATOL, rtol=RTOL), (
        float(jnp.max(jnp.abs(out1 - ref1))))

    # Case 2: unaligned shapes exercise C / N padding + masked softmax.
    x2 = jax.random.normal(k2, (2, 12, 10, 10), dtype=jnp.float32)
    out2 = jax.block_until_ready(channel_attention_block(x2, gamma))
    ref2 = _reference(x2, gamma)
    assert out2.shape == x2.shape
    assert jnp.allclose(out2, ref2, atol=ATOL, rtol=RTOL), (
        float(jnp.max(jnp.abs(out2 - ref2))))

    # Case 3: tiny tile budget forces the streamed (Kn > 1) two-phase path.
    x3 = jax.random.normal(k3, (2, 8, 32, 32), dtype=jnp.float32)
    out3 = jax.block_until_ready(
        channel_attention_block(x3, gamma, tile_budget_bytes=8 * 1024))
    ref3 = _reference(x3, gamma)
    assert out3.shape == x3.shape
    assert jnp.allclose(out3, ref3, atol=ATOL, rtol=RTOL), (
        float(jnp.max(jnp.abs(out3 - ref3))))

    print("KERNEL_OK")
</pallas_src>

<mosaic_0001>
module attributes {stable_mosaic.version = 11 : i64} {
  func.func @_fused_channel_attention_kernel(%arg0: i32, %arg1: i32, %arg2: i32, %arg3: memref<1xf32, #tpu.memory_space<smem>>, %arg4: memref<1x8x256xf32, #tpu.memory_space<vmem>>, %arg5: memref<1x8x256xf32, #tpu.memory_space<vmem>>, %arg6: memref<1x8x8xf32, #tpu.memory_space<vmem>>) attributes {dimension_semantics = [#tpu.dimension_semantics<parallel>, #tpu.dimension_semantics<arbitrary>, #tpu.dimension_semantics<arbitrary>], iteration_bounds = array<i64: 2, 2, 1>, scalar_prefetch = 0 : i64, scratch_operands = 1 : i64, tpu.core_type = #tpu.core_type<tc>, window_params = [{transform_indices = @transform_0, window_bounds = array<i64: 1>}, {transform_indices = @transform_1, window_bounds = array<i64: 1, 8, 256>}, {transform_indices = @transform_2, window_bounds = array<i64: 1, 8, 256>}]} {
    %c0_i32 = arith.constant 0 : i32
    %0 = arith.cmpi eq, %arg1, %c0_i32 : i32
    %1 = arith.extui %0 : i1 to i32
    %c0_i32_0 = arith.constant 0 : i32
    %2 = arith.cmpi ne, %1, %c0_i32_0 : i32
    scf.if %2 {
      %c0_i32_2 = arith.constant 0 : i32
      %6 = arith.cmpi eq, %arg2, %c0_i32_2 : i32
      %7 = arith.extui %6 : i1 to i32
      %c0_i32_3 = arith.constant 0 : i32
      %8 = arith.cmpi ne, %7, %c0_i32_3 : i32
      scf.if %8 {
        %cst_14 = arith.constant 0.000000e+00 : f32
        %17 = vector.broadcast %cst_14 : f32 to vector<1x8x8xf32>
        %c0_15 = arith.constant 0 : index
        %c0_16 = arith.constant 0 : index
        %c0_17 = arith.constant 0 : index
        %18 = vector.load %arg6[%c0_15, %c0_16, %c0_17] : memref<1x8x8xf32, #tpu.memory_space<vmem>>, vector<1x8x8xf32>
        tpu.vector_store %arg6[%c0_15, %c0_16, %c0_17], %17 {strides = array<i32>} : memref<1x8x8xf32, #tpu.memory_space<vmem>>, vector<1x8x8xf32>,
      } else {
      }
      %c0 = arith.constant 0 : index
      %c0_4 = arith.constant 0 : index
      %c0_5 = arith.constant 0 : index
      %9 = vector.load %arg4[%c0, %c0_4, %c0_5] : memref<1x8x256xf32, #tpu.memory_space<vmem>>, vector<1x8x256xf32>
      %c0_6 = arith.constant 0 : index
      %c0_7 = arith.constant 0 : index
      %c0_8 = arith.constant 0 : index
      %10 = vector.load %arg6[%c0_6, %c0_7, %c0_8] : memref<1x8x8xf32, #tpu.memory_space<vmem>>, vector<1x8x8xf32>
      %cst = arith.constant dense<0.000000e+00> : vector<1x8x8xf32>
      %11 = tpu.matmul %9, %9, %cst {dimension_numbers = #tpu.dot_dimension_numbers<[2], [2], [1], [1], [0, 0, 0, 1, 1, 1], [0], [0]>} : vector<1x8x256xf32>, vector<1x8x256xf32>, vector<1x8x8xf32> -> vector<1x8x8xf32>
      %12 = arith.addf %10, %11 : vector<1x8x8xf32>
      %c0_9 = arith.constant 0 : index
      %c0_10 = arith.constant 0 : index
      %c0_11 = arith.constant 0 : index
      %13 = vector.load %arg6[%c0_9, %c0_10, %c0_11] : memref<1x8x8xf32, #tpu.memory_space<vmem>>, vector<1x8x8xf32>
      tpu.vector_store %arg6[%c0_9, %c0_10, %c0_11], %12 {strides = array<i32>} : memref<1x8x8xf32, #tpu.memory_space<vmem>>, vector<1x8x8xf32>,
      %c0_i32_12 = arith.constant 0 : i32
      %14 = arith.cmpi eq, %arg2, %c0_i32_12 : i32
      %15 = arith.extui %14 : i1 to i32
      %c0_i32_13 = arith.constant 0 : i32
      %16 = arith.cmpi ne, %15, %c0_i32_13 : i32
      scf.if %16 {
        %c0_14 = arith.constant 0 : index
        %c0_15 = arith.constant 0 : index
        %c0_16 = arith.constant 0 : index
        %17 = vector.load %arg6[%c0_14, %c0_15, %c0_16] : memref<1x8x8xf32, #tpu.memory_space<vmem>>, vector<1x8x8xf32>
        %cst_17 = arith.constant 0.000000e+00 : f32
        %18 = vector.broadcast %cst_17 : f32 to vector<1x8x8xf32>
        %19 = arith.subf %18, %17 : vector<1x8x8xf32>
        %cst_18 = arith.constant dense<0xFF800000> : vector<1x8xf32>
        %20 = vector.multi_reduction <maximumf>, %19, %cst_18 [2] : vector<1x8x8xf32> to vector<1x8xf32>
        %21 = vector.shape_cast %20 : vector<1x8xf32> to vector<1x8x1xf32>
        %22 = vector.broadcast %21 : vector<1x8x1xf32> to vector<1x8x8xf32>
        %23 = arith.subf %19, %22 : vector<1x8x8xf32>
        %24 = math.exp %23 : vector<1x8x8xf32>
        %cst_19 = arith.constant dense<0.000000e+00> : vector<1x8xf32>
        %25 = vector.multi_reduction <add>, %24, %cst_19 [2] : vector<1x8x8xf32> to vector<1x8xf32>
        %26 = vector.shape_cast %25 : vector<1x8xf32> to vector<1x8x1xf32>
        %c0_20 = arith.constant 0 : index
        %27 = memref.load %arg3[%c0_20] : memref<1xf32, #tpu.memory_space<smem>>
        %28 = vector.broadcast %27 : f32 to vector<1x8x8xf32>
        %29 = arith.mulf %28, %24 : vector<1x8x8xf32>
        %30 = tpu.reciprocal %26 {approx = true} : vector<1x8x1xf32> -> vector<1x8x1xf32>
        %31 = vector.broadcast %30 : vector<1x8x1xf32> to vector<1x8x8xf32>
        %32 = arith.mulf %29, %31 : vector<1x8x8xf32>
        %c0_21 = arith.constant 0 : index
        %c0_22 = arith.constant 0 : index
        %c0_23 = arith.constant 0 : index
        %33 = vector.load %arg6[%c0_21, %c0_22, %c0_23] : memref<1x8x8xf32, #tpu.memory_space<vmem>>, vector<1x8x8xf32>
        tpu.vector_store %arg6[%c0_21, %c0_22, %c0_23], %32 {strides = array<i32>} : memref<1x8x8xf32, #tpu.memory_space<vmem>>, vector<1x8x8xf32>,
      } else {
      }
    } else {
    }
    %c1_i32 = arith.constant 1 : i32
    %3 = arith.cmpi eq, %arg1, %c1_i32 : i32
    %4 = arith.extui %3 : i1 to i32
    %c0_i32_1 = arith.constant 0 : i32
    %5 = arith.cmpi ne, %4, %c0_i32_1 : i32
    scf.if %5 {
      %c0 = arith.constant 0 : index
      %c0_2 = arith.constant 0 : index
      %c0_3 = arith.constant 0 : index
      %6 = vector.load %arg4[%c0, %c0_2, %c0_3] : memref<1x8x256xf32, #tpu.memory_space<vmem>>, vector<1x8x256xf32>
      %c0_4 = arith.constant 0 : index
      %c0_5 = arith.constant 0 : index
      %c0_6 = arith.constant 0 : index
      %7 = vector.load %arg6[%c0_4, %c0_5, %c0_6] : memref<1x8x8xf32, #tpu.memory_space<vmem>>, vector<1x8x8xf32>
      %cst = arith.constant dense<0.000000e+00> : vector<1x8x256xf32>
      %8 = tpu.matmul %7, %6, %cst {dimension_numbers = #tpu.dot_dimension_numbers<[2], [1], [1], [2], [0, 0, 0, 1, 1, 2], [0], [0]>} : vector<1x8x8xf32>, vector<1x8x256xf32>, vector<1x8x256xf32> -> vector<1x8x256xf32>
      %9 = arith.addf %8, %6 : vector<1x8x256xf32>
      %c0_7 = arith.constant 0 : index
      %c0_8 = arith.constant 0 : index
      %c0_9 = arith.constant 0 : index
      %10 = vector.load %arg5[%c0_7, %c0_8, %c0_9] : memref<1x8x256xf32, #tpu.memory_space<vmem>>, vector<1x8x256xf32>
      tpu.vector_store %arg5[%c0_7, %c0_8, %c0_9], %9 {strides = array<i32>} : memref<1x8x256xf32, #tpu.memory_space<vmem>>, vector<1x8x256xf32>,
    } else {
    }
    return
  }
  func.func @transform_0(%arg0: i32, %arg1: i32, %arg2: i32) -> i32 {
    %c0_i32 = arith.constant 0 : i32
    %c0_i32_0 = arith.constant 0 : i32
    return %c0_i32 : i32
  }
  func.func @transform_1(%arg0: i32, %arg1: i32, %arg2: i32) -> (i32, i32, i32) {
    %c0_i32 = arith.constant 0 : i32
    %c0_i32_0 = arith.constant 0 : i32
    return %arg0, %c0_i32, %arg2 : i32, i32, i32
  }
  func.func @transform_2(%arg0: i32, %arg1: i32, %arg2: i32) -> (i32, i32, i32) {
    %0 = arith.muli %arg2, %arg1 : i32
    %c0_i32 = arith.constant 0 : i32
    %c0_i32_0 = arith.constant 0 : i32
    return %arg0, %c0_i32, %0 : i32, i32, i32
  }
}

</mosaic_0001>

<llo_original>
// kernel: tpu_custom_call.1
$region0: #{tpu_custom_call.1}
  #allocation0 [shape = 'u32[]', space=smem, size = 0x4, offset = 0x4, fixed_abs, tag = 'smem constant byte address 0x4 - core index']
  #allocation1 [shape = 'u32[72,128]{1,0:T(1,128)}', space=vmem, size = 0x9000, scoped, tag = 'internal scratch']
  #allocation2 [shape = 'f32[1,8,8]{2,1,0:T(8,128)}', space=vmem, size = 0x1000, scoped, tag = 'scratch operand']
  #allocation3 [shape = 'f32[1]{0:T(128)S(6)}', space=smem, size = 0x200, scoped, tag = 'scoped memory for tpu_custom_call.1']
  %s0 = inlined_call_operand.<no memory space> [shape: f32[1], index: 0, kind: input, shape index: {}]
  %s1 = inlined_call_operand.hbm [shape: f32[2,8,256], index: 1, kind: input, shape index: {}]
  %s2 = inlined_call_operand.hbm [shape: f32[2,8,256], index: 2, kind: output, shape index: {}]
  %s3 = sld [smem:[#allocation0]]
  $region61: #{tpu_custom_call.1} parent=0
    _
  %s5 = ssub.s32 1, %s3
  %s6 = scalar_select 0, %s5, %s3
  %7 = sst [smem:[#allocation3]] %s0
  $region1: #{tpu_custom_call.1} parent=0
    #allocation4 [shape = 'u8[16384]{0}', space=vmem, size = 0x4000, scoped, tag = 'input window, operand 1']
    #allocation5 [shape = 's32[2]{0}', space=sflag, size = 0x8, scoped, tag = 'scoped memory for tpu_custom_call.1']
    #allocation6 [shape = 's32[2]{0}', space=sflag, size = 0x8, scoped, tag = 'scoped memory for tpu_custom_call.1']
    #allocation7 [shape = 'u8[16384]{0}', space=vmem, size = 0x4000, scoped, tag = 'output window, operand 0']
    %8 = vsyncpa [#allocation5], 0
    %s9 = scalar_lea.sflag [#allocation5], 1
    %10 = vsyncpa %s9, 0
    %11 = vsyncpa [#allocation6], 0
    %s12 = scalar_lea.sflag [#allocation6], 1
    %13 = vsyncpa %s12, 0
    loop: start=0, step=1, limit=6
    $region2: #{tpu_custom_call.1} parent=1 // loop_pre_header
      _
    $region3: #{tpu_custom_call.1} parent=1 // loop_header
      %s15 = sphi 0, %s19
      %p16 = scmp.ge.s32.totalorder %s15, 6
      %s22 = sphi 0, %s41
      %s23 = sphi 0, %s37
      %s24 = sphi 0, %s33
      %s25 = sphi 0, %s22
      %s26 = sphi 0, %s23
      %s27 = sphi 0, %s24
      %s28 = sphi 0, %s25
      %s29 = sphi 0, %s26
      %s30 = sphi 0, %s27
      %s42 = sphi 0, %s42
      %s44 = sphi 0, %s42
      %s45 = sphi 0, %s44
      %s59 = sphi 0, %s45
      %s67 = sphi 0, %s69
      %s70 = sphi 0, %s67
      %s71 = sphi 0, %s70
      %s87 = sphi 0, %s71
      %s97 = sphi 0, %s99
      %s100 = sphi 0, %s97
      %s101 = sphi 0, %s100
      %s117 = sphi 0, %s101
    $region4: #{tpu_custom_call.1} parent=1 // loop_header_branch
      %18 = sbr.rel (%p16) target = $region8
    $region5: #{tpu_custom_call.1} parent=1 // loop_body
      %s20 = ssub.s32 %s15, 1
      %s21 = ssub.s32 %s15, 2
      %s31 = sadd.s32 1, %s24
      %p32 = scmp.ge.s32.totalorder %s31, 1
      %s33 = scalar_select %p32, 0, %s31
      %s34 = sadd.s32 1, %s23
      %s35 = scalar_select %p32, %s34, %s23
      %p36 = scmp.ge.s32.totalorder %s35, 2
      %s37 = scalar_select %p36, 0, %s35
      %s38 = sadd.s32 1, %s22
      %s39 = scalar_select %p36, %s38, %s22
      %p40 = scmp.ge.s32.totalorder %s39, 2
      %s41 = scalar_select %p40, 0, %s39
      %s43 = sadd.s32 %s42, 1
      %p46 = scmp.eq.s32.totalorder %s15, 3
      %p47 = scmp.ne.s32.totalorder %s42, %s44
      %p48 = scmp.eq.s32.totalorder %s15, 0
      %p49 = por %p47, %p48
      %p50 = scmp.ne.s32.totalorder %s42, %s44
      %p51 = scmp.eq.s32.totalorder %s20, 3
      %p52 = por %p50, %p51
      %p53 = scmp.ne.s32.totalorder %s44, %s45
      %p54 = scmp.eq.s32.totalorder %s20, 0
      %p55 = por %p53, %p54
      %p56 = scmp.ne.s32.totalorder %s44, %s45
      %p57 = scmp.eq.s32.totalorder %s21, 3
      %p58 = por %p56, %p57
      %p60 = scmp.ne.s32.totalorder %s45, %s59
      %p61 = scmp.eq.s32.totalorder %s21, 0
      %p62 = por %p60, %p61
      %s63 = ssub.s32 %s22, %s41
      %s64 = ssub.s32 %s24, %s33
      %s65 = sor.u32 %s63, %s64
      %p66 = scmp.eq.s32.totalorder %s65, 0
      %s68 = sadd.s32 %s67, 1
      %s69 = scalar_select %p66, %s67, %s68
      %p72 = pneg %p66
      %p73 = scmp.eq.s32.totalorder %s15, 3
      %p74 = por %p72, %p73
      %p75 = scmp.ne.s32.totalorder %s67, %s70
      %p76 = scmp.eq.s32.totalorder %s15, 0
      %p77 = por %p75, %p76
      %p78 = scmp.ne.s32.totalorder %s67, %s70
      %p79 = scmp.eq.s32.totalorder %s20, 3
      %p80 = por %p78, %p79
      %p81 = scmp.ne.s32.totalorder %s70, %s71
      %p82 = scmp.eq.s32.totalorder %s20, 0
      %p83 = por %p81, %p82
      %p84 = scmp.ne.s32.totalorder %s70, %s71
      %p85 = scmp.eq.s32.totalorder %s21, 3
      %p86 = por %p84, %p85
      %p88 = scmp.ne.s32.totalorder %s71, %s87
      %p89 = scmp.eq.s32.totalorder %s21, 0
      %p90 = por %p88, %p89
      %s91 = smul.u32 %s24, %s23
      %s92 = smul.u32 %s33, %s37
      %s93 = ssub.s32 %s22, %s41
      %s94 = ssub.s32 %s91, %s92
      %s95 = sor.u32 %s93, %s94
      %p96 = scmp.eq.s32.totalorder %s95, 0
      %s98 = sadd.s32 %s97, 1
      %s99 = scalar_select %p96, %s97, %s98
      %p102 = pneg %p96
      %p103 = scmp.eq.s32.totalorder %s15, 3
      %p104 = por %p102, %p103
      %p105 = scmp.ne.s32.totalorder %s97, %s100
      %p106 = scmp.eq.s32.totalorder %s15, 0
      %p107 = por %p105, %p106
      %p108 = scmp.ne.s32.totalorder %s97, %s100
      %p109 = scmp.eq.s32.totalorder %s20, 3
      %p110 = por %p108, %p109
      %p111 = scmp.ne.s32.totalorder %s100, %s101
      %p112 = scmp.eq.s32.totalorder %s20, 0
      %p113 = por %p111, %p112
      %p114 = scmp.ne.s32.totalorder %s100, %s101
      %p115 = scmp.eq.s32.totalorder %s21, 3
      %p116 = por %p114, %p115
      %p118 = scmp.ne.s32.totalorder %s101, %s117
      %p119 = scmp.eq.s32.totalorder %s21, 0
      %p120 = por %p118, %p119
      %p121 = scmp.le.s32.totalorder 1, %s15
      %p122 = scmp.lt.s32.totalorder %s15, 5
      %p123 = pnand %p121, %p122
      %p124 = pneg %p123
      // Predicated region
      $region9: #{tpu_custom_call.1} parent=5 // pred_check
        _
      $region10: #{tpu_custom_call.1} parent=5 // pred_check_branch
        %126 = sbr.rel (%p123) target = $region12
      $region11: #{tpu_custom_call.1} parent=5 // pred_region
        %s127 = ssub.s32 %s15, 1
        // Predicated region
        $region13: #{tpu_custom_call.1} parent=11 // pred_check
          %p128 = pneg %p55
        $region14: #{tpu_custom_call.1} parent=11 // pred_check_branch
          %130 = sbr.rel (%p128) target = $region16
        $region15: #{tpu_custom_call.1} parent=11 // pred_region
          _
        $region16: #{tpu_custom_call.1} parent=11 // pred_fallthru
          _
      $region12: #{tpu_custom_call.1} parent=5 // pred_fallthru
        _
      %p131 = scmp.lt.s32.totalorder %s15, 4
      // Predicated region
      $region17: #{tpu_custom_call.1} parent=5 // pred_check
        %p132 = pneg %p131
      $region18: #{tpu_custom_call.1} parent=5 // pred_check_branch
        %134 = sbr.rel (%p132) target = $region20
      $region19: #{tpu_custom_call.1} parent=5 // pred_region
        // Predicated region
        $region21: #{tpu_custom_call.1} parent=19 // pred_check
          %p135 = pneg %p77
        $region22: #{tpu_custom_call.1} parent=19 // pred_check_branch
          %137 = sbr.rel (%p135) target = $region24
        $region23: #{tpu_custom_call.1} parent=19 // pred_region
          %s138 = sand.u32 %s67, 1
          %s139 = scalar_lea.sflag [#allocation5], %s138
          %s140 = sand.u32 %s67, 1
          %s141 = smul.addr %s140, 16
          %s142 = scalar_lea.vmem [#allocation4], %s141
          %s143 = smul.u32 2, %s24
          %145 = vsyncadd %s139, 0
          %s146 = smul.addr %s22, 2
          %s147 = sadd.s32 %s143, %s146
          %s148 = smul.addr %s147, 8
          %s149 = scalar_lea.hbm %s1, %s148
          %s151 = sshll.u32 %s149, 4
          %s152 = int_to_ptr.hbm [resolvable:$true] %s151
          %s153 = sshll.u32 %s142, 4
          %s154 = int_to_ptr.vmem [resolvable:$true] %s153
          %156 = dma.hbm_to_vmem [thread:$0]  %s152, 256, %s154, %s139
        $region24: #{tpu_custom_call.1} parent=19 // pred_fallthru
          _
      $region20: #{tpu_custom_call.1} parent=5 // pred_fallthru
        _
      %p157 = scmp.le.s32.totalorder 1, %s15
      %p158 = scmp.lt.s32.totalorder %s15, 5
      %p159 = pnand %p157, %p158
      %p160 = pneg %p159
      // Predicated region
      $region25: #{tpu_custom_call.1} parent=5 // pred_check
        _
      $region26: #{tpu_custom_call.1} parent=5 // pred_check_branch
        %162 = sbr.rel (%p159) target = $region28
      $region27: #{tpu_custom_call.1} parent=5 // pred_region
        %s163 = ssub.s32 %s15, 1
        %s164 = sand.u32 %s70, 1
        %s165 = scalar_lea.sflag [#allocation5], %s164
        %s166 = sand.u32 %s70, 1
        %s167 = smul.addr %s166, 16
        %s168 = scalar_lea.vmem [#allocation4], %s167
        // Predicated region
        $region29: #{tpu_custom_call.1} parent=27 // pred_check
          %p169 = pneg %p83
        $region30: #{tpu_custom_call.1} parent=27 // pred_check_branch
          %171 = sbr.rel (%p169) target = $region32
        $region31: #{tpu_custom_call.1} parent=27 // pred_region
          %173 = dma.done %s165, 256
        $region32: #{tpu_custom_call.1} parent=27 // pred_fallthru
          _
        %p174 = pneg %p55
        %p175 = pneg %p52
        %s176 = sand.u32 %s70, 1
        %s177 = scalar_lea.sflag [#allocation5], %s176
        %s178 = sand.u32 %s70, 1
        %s179 = smul.addr %s178, 16
        %s180 = scalar_lea.vmem [#allocation4], %s179
        %p181 = pneg %p83
        %p182 = pneg %p80
        %p183 = pneg %p113
        %p184 = pneg %p110
        %s185 = sand.u32 %s100, 1
        %s186 = scalar_lea.sflag [#allocation6], %s185
        %s187 = sand.u32 %s100, 1
        %s188 = smul.addr %s187, 16
        %s189 = scalar_lea.vmem [#allocation7], %s188
        %s190 = smul.u32 2, %s27
        %s191 = smul.u32 %s27, %s26
        %s192 = smul.u32 2, %s191
        %p193 = scmp.eq.s32.totalorder %s26, 0
        // Predicated region
        $region33: #{tpu_custom_call.1} parent=27 // pred_check
          %p194 = pneg %p193
        $region34: #{tpu_custom_call.1} parent=27 // pred_check_branch
          %196 = sbr.rel (%p194) target = $region36
        $region35: #{tpu_custom_call.1} parent=27 // pred_region
          %p197 = scmp.eq.s32.totalorder %s27, 0
          // Predicated region
          $region37: #{tpu_custom_call.1} parent=35 // pred_check
            %p198 = pneg %p197
          $region38: #{tpu_custom_call.1} parent=35 // pred_check_branch
            %200 = sbr.rel (%p198) target = $region40
          $region39: #{tpu_custom_call.1} parent=35 // pred_region
            %vm201 = vcmask 64512
            %202 = vst.msk [vmem:[#allocation2] sm:$0xff] %vm201, 0.0
          $region40: #{tpu_custom_call.1} parent=35 // pred_fallthru
            _
          %v203 = vld [vmem:[%s168] sm:$0xff]
          %v204 = vld [vmem:[%s168 + $0x8] sm:$0xff]
          %v205 = vld [vmem:[#allocation2] sm:$0xff]
          %206 = vmatpush.xpose.msra.mxu0 0.0
          %207 = vmatpush.xpose.msra.mxu0 0.0
          %208 = vmatpush.xpose.msra.mxu0 0.0
          %209 = vmatpush.xpose.msra.mxu0 0.0
          %210 = vmatpush.xpose.msra.mxu0 0.0
          %211 = vmatpush.xpose.msra.mxu0 0.0
          %212 = vmatpush.xpose.msra.mxu0 0.0
          %213 = vmatpush.xpose.msra.mxu0 0.0
          %214 = vmatpush.xpose.msra.mxu0 0.0
          %215 = vmatpush.xpose.msra.mxu0 0.0
          %216 = vmatpush.xpose.msra.mxu0 0.0
          %217 = vmatpush.xpose.msra.mxu0 0.0
          %218 = vmatpush.xpose.msra.mxu0 0.0
          %219 = vmatpush.xpose.msra.mxu0 0.0
          %220 = vmatpush.xpose.msra.mxu0 0.0
          %221 = vmatpush.xpose.msra.mxu0 %v203
          %222 = vmatmul.f32.gmra.mxu0 %v203
          %v223 = vpop.f32.mrf.mxu0
          %v224 = vadd.f32 0.0, %v223
          %225 = vdwg.mxu0
          %226 = vmatpush.xpose.msra.mxu0 0.0
          %227 = vmatpush.xpose.msra.mxu0 0.0
          %228 = vmatpush.xpose.msra.mxu0 0.0
          %229 = vmatpush.xpose.msra.mxu0 0.0
          %230 = vmatpush.xpose.msra.mxu0 0.0
          %231 = vmatpush.xpose.msra.mxu0 0.0
          %232 = vmatpush.xpose.msra.mxu0 0.0
          %233 = vmatpush.xpose.msra.mxu0 0.0
          %234 = vmatpush.xpose.msra.mxu0 0.0
          %235 = vmatpush.xpose.msra.mxu0 0.0
          %236 = vmatpush.xpose.msra.mxu0 0.0
          %237 = vmatpush.xpose.msra.mxu0 0.0
          %238 = vmatpush.xpose.msra.mxu0 0.0
          %239 = vmatpush.xpose.msra.mxu0 0.0
          %240 = vmatpush.xpose.msra.mxu0 0.0
          %241 = vmatpush.xpose.msra.mxu0 %v204
          %242 = vmatmul.f32.gmra.mxu0 %v204
          %v243 = vpop.f32.mrf.mxu0
          %v244 = vadd.f32 %v224, %v243
          %245 = vdwg.mxu0
          %v246 = vadd.f32 %v205, %v244
          %vm247 = vcmask 64512
          %248 = vst.msk [vmem:[#allocation2] sm:$0xff] %vm247, %v246
          // Predicated region
          $region41: #{tpu_custom_call.1} parent=35 // pred_check
            %p249 = pneg %p197
          $region42: #{tpu_custom_call.1} parent=35 // pred_check_branch
            %251 = sbr.rel (%p249) target = $region44
          $region43: #{tpu_custom_call.1} parent=35 // pred_region
            %v252 = vld [vmem:[#allocation2] sm:$0xff]
            %v253 = vsub.f32 0.0, %v252
            %v254 = vsel %vm247, %v253, -inf
            %255 = vmax.xlane.f32.xlu0 %v254
            %v256 = vpop.xlane.xlu0 %255
            %v257 = vsub.f32 %v253, %v256
            %v258 = vmul.f32 %v257, 1.442695
            %v259 = vpow.pop %v258
            %v260 = vsel %vm247, %v259, 0.0
            %261 = vadd.xlane.f32.xlu0 %v260
            %v262 = vpop.xlane.xlu0 %261
            %s263 = sld [smem:[#allocation3]]
            %v264 = vstv %s263
            %v265 = vmul.f32 %v264, %v259
            %v266 = vrcp.pop %v262
            %v267 = vmul.f32 %v265, %v266
            %268 = vst.msk [vmem:[#allocation2] sm:$0xff] %vm247, %v267
          $region44: #{tpu_custom_call.1} parent=35 // pred_fallthru
            _
        $region36: #{tpu_custom_call.1} parent=27 // pred_fallthru
          _
        %p269 = scmp.eq.s32.totalorder %s26, 1
        // Predicated region
        $region45: #{tpu_custom_call.1} parent=27 // pred_check
          %p270 = pneg %p269
        $region46: #{tpu_custom_call.1} parent=27 // pred_check_branch
          %272 = sbr.rel (%p270) target = $region48
        $region47: #{tpu_custom_call.1} parent=27 // pred_region
          %v273 = vld [vmem:[%s168] sm:$0xff]
          %v274 = vld [vmem:[%s168 + $0x8] sm:$0xff]
          %v275 = vld [vmem:[#allocation2] sm:$0xff]
          %vm276 = vcmask 64512
          %v278 = vsel %vm276, %v275, 0
          %280 = vmatpush.msra.mxu0 0.0
          %281 = vmatpush.msra.mxu0 0.0
          %282 = vmatpush.msra.mxu0 0.0
          %283 = vmatpush.msra.mxu0 0.0
          %284 = vmatpush.msra.mxu0 0.0
          %285 = vmatpush.msra.mxu0 0.0
          %286 = vmatpush.msra.mxu0 0.0
          %287 = vmatpush.msra.mxu0 0.0
          %288 = vmatpush.msra.mxu0 0.0
          %289 = vmatpush.msra.mxu0 0.0
          %290 = vmatpush.msra.mxu0 0.0
          %291 = vmatpush.msra.mxu0 0.0
          %292 = vmatpush.msra.mxu0 0.0
          %293 = vmatpush.msra.mxu0 0.0
          %294 = vmatpush.msra.mxu0 0.0
          %295 = vmatpush.msra.mxu0 %v273
          %296 = vmatmul.f32.gmra.mxu0 %v278
          %v297 = vpop.f32.mrf.mxu0
          %v298 = vadd.f32 %v273, %v297
          %299 = vdwg.mxu0
          %300 = vmatpush.msra.mxu0 0.0
          %301 = vmatpush.msra.mxu0 0.0
          %302 = vmatpush.msra.mxu0 0.0
          %303 = vmatpush.msra.mxu0 0.0
          %304 = vmatpush.msra.mxu0 0.0
          %305 = vmatpush.msra.mxu0 0.0
          %306 = vmatpush.msra.mxu0 0.0
          %307 = vmatpush.msra.mxu0 0.0
          %308 = vmatpush.msra.mxu0 0.0
          %309 = vmatpush.msra.mxu0 0.0
          %310 = vmatpush.msra.mxu0 0.0
          %311 = vmatpush.msra.mxu0 0.0
          %312 = vmatpush.msra.mxu0 0.0
          %313 = vmatpush.msra.mxu0 0.0
          %314 = vmatpush.msra.mxu0 0.0
          %315 = vmatpush.msra.mxu0 %v274
          %316 = vmatmul.f32.gmra.mxu0 %v278
          %v317 = vpop.f32.mrf.mxu0
          %v318 = vadd.f32 %v274, %v317
          %319 = vdwg.mxu0
          %320 = vst [vmem:[%s189] sm:$0xff] %v298
          %321 = vst [vmem:[%s189 + $0x8] sm:$0xff] %v318
        $region48: #{tpu_custom_call.1} parent=27 // pred_fallthru
          _
        %s322 = sand.u32 %s100, 1
        %s323 = scalar_lea.sflag [#allocation6], %s322
        %s324 = sand.u32 %s100, 1
        %s325 = smul.addr %s324, 16
        %s326 = scalar_lea.vmem [#allocation7], %s325
        // Predicated region
        $region49: #{tpu_custom_call.1} parent=27 // pred_check
          %p327 = pneg %p110
        $region50: #{tpu_custom_call.1} parent=27 // pred_check_branch
          %329 = sbr.rel (%p327) target = $region52
        $region51: #{tpu_custom_call.1} parent=27 // pred_region
          %s330 = smul.u32 %s27, %s26
          %s331 = smul.u32 2, %s330
          %333 = vsyncadd %s323, 0
          %s334 = smul.addr %s25, 2
          %s335 = sadd.s32 %s331, %s334
          %s336 = smul.addr %s335, 8
          %s337 = scalar_lea.hbm %s2, %s336
          %s339 = sshll.u32 %s326, 4
          %s340 = int_to_ptr.vmem [resolvable:$true] %s339
          %s341 = sshll.u32 %s337, 4
          %s342 = int_to_ptr.hbm [resolvable:$true] %s341
          %344 = dma.vmem_to_hbm [thread:$0]  %s340, 256, %s342, %s323
        $region52: #{tpu_custom_call.1} parent=27 // pred_fallthru
          _
      $region28: #{tpu_custom_call.1} parent=5 // pred_fallthru
        _
      %p345 = scmp.le.s32.totalorder 2, %s15
      // Predicated region
      $region53: #{tpu_custom_call.1} parent=5 // pred_check
        %p346 = pneg %p345
      $region54: #{tpu_custom_call.1} parent=5 // pred_check_branch
        %348 = sbr.rel (%p346) target = $region56
      $region55: #{tpu_custom_call.1} parent=5 // pred_region
        %s349 = ssub.s32 %s15, 2
        // Predicated region
        $region57: #{tpu_custom_call.1} parent=55 // pred_check
          %p350 = pneg %p116
        $region58: #{tpu_custom_call.1} parent=55 // pred_check_branch
          %352 = sbr.rel (%p350) target = $region60
        $region59: #{tpu_custom_call.1} parent=55 // pred_region
          %s353 = sand.u32 %s101, 1
          %s354 = scalar_lea.sflag [#allocation6], %s353
          %s355 = sand.u32 %s101, 1
          %s356 = smul.addr %s355, 16
          %s357 = scalar_lea.vmem [#allocation7], %s356
          %359 = dma.done %s354, 256
        $region60: #{tpu_custom_call.1} parent=55 // pred_fallthru
          _
      $region56: #{tpu_custom_call.1} parent=5 // pred_fallthru
        _
    $region6: #{tpu_custom_call.1} parent=1 // loop_footer
      %s19 = sadd.s32 1, %s15
    $region7: #{tpu_custom_call.1} parent=1 // loop_footer_branch
      %14 = sbr.rel target = $region3
    $region8: #{tpu_custom_call.1} parent=1 // loop_exit
      _
    %360 = vsyncpa [#allocation5], 1
    %s361 = scalar_lea.sflag [#allocation5], 1
    %362 = vsyncpa %s361, 1
    %363 = vsyncpa [#allocation6], 1
    %s364 = scalar_lea.sflag [#allocation6], 1
    %365 = vsyncpa %s364, 1

</llo_original>
